<compile_context>
chip_gen: v5e
topology: v5e:2x2
jax: 0.10.0
libtpu: 0.0.40
codegen_flags: <defaults>
</compile_context>

<pallas_src>
import jax
import jax.numpy as jnp
from jax.experimental import pallas as pl
from jax.experimental.pallas import tpu as pltpu


_TB_MAX = 4096  # lanes (batch rows) per grid step; sweep 1024-8192 if desired


def _pick_tb(batch):
    """Lane-tile size: multiple of 128, >= 2 grid steps when batch allows."""
    if batch <= 128:
        return batch                      # single block; last dim == full dim
    half = pl.cdiv(batch, 2)              # aim for >= 2 steps (v7x megacore)
    tb = 128 * pl.cdiv(half, 128)
    return min(tb, _TB_MAX)


def _hard_sharing_kernel(x_t_ref, w_sh_ref, b_sh_ref, w_hd_ref, b_hd_ref,
                         mul_ref, div_ref):
    # Feature-major tiles: x_t_ref is (in_features, TB). Weights are stored in
    # PyTorch (out_features, in_features) layout, biases as (out_features, 1).
    x_t = x_t_ref[...]                                  # (2, TB)
    w_sh = w_sh_ref[...]                                # (shared, 2)
    in_features = x_t.shape[0]

    # ---- Layer 1 on the VPU: rank-1 broadcast FMAs, bias folded into the
    # first one (contraction depth K == 2 is far too shallow for the MXU). ----
    h = b_sh_ref[...] + w_sh[:, 0:1] * x_t[0:1, :]      # (shared, TB)
    for k in range(1, in_features):                     # static unroll (K = 2)
        h = h + w_sh[:, k:k + 1] * x_t[k:k + 1, :]
    h = jnp.maximum(h, 0.0)                             # ReLU

    # ---- Fused task heads: one (2*task, shared) x (shared, TB) MXU matmul,
    # lane-dense (2*task, TB) result, split at the sublane-aligned boundary
    # straight into the two output refs (no extra HBM pass in the wrapper). ----
    out = (jnp.dot(w_hd_ref[...], h, preferred_element_type=jnp.float32)
           + b_hd_ref[...])                             # (2*task, TB)
    task = mul_ref.shape[0]
    mul_ref[...] = out[:task, :]
    div_ref[...] = out[task:, :]


@jax.jit
def hard_parameter_sharing_forward_fm(x_t, prepared):
    """Fast path. x_t: (in_features, B) feature-major.

    Returns (mul_t, div_t), each (task_size, B) feature-major, straight out of
    pallas_call — no padding, slicing, splitting or transposing in the wrapper.
    """
    w_sh, b_sh, w_heads, b_heads = prepared
    in_features, batch = x_t.shape
    shared = w_sh.shape[0]
    two_task = w_heads.shape[0]
    task = two_task // 2

    tb = _pick_tb(batch)
    grid = (pl.cdiv(batch, tb),)          # ragged last block handled by Pallas

    mul_t, div_t = pl.pallas_call(
        _hard_sharing_kernel,
        out_shape=(jax.ShapeDtypeStruct((task, batch), jnp.float32),
                   jax.ShapeDtypeStruct((task, batch), jnp.float32)),
        grid=grid,
        in_specs=[
            pl.BlockSpec((in_features, tb), lambda i: (0, i)),       # x^T tile
            pl.BlockSpec((shared, in_features), lambda i: (0, 0)),   # resident
            pl.BlockSpec((shared, 1), lambda i: (0, 0)),             # resident
            pl.BlockSpec((two_task, shared), lambda i: (0, 0)),      # resident
            pl.BlockSpec((two_task, 1), lambda i: (0, 0)),           # resident
        ],
        out_specs=(pl.BlockSpec((task, tb), lambda i: (0, i)),
                   pl.BlockSpec((task, tb), lambda i: (0, i))),
        compiler_params=pltpu.CompilerParams(
            dimension_semantics=("parallel",)),   # megacore / v7x 2nd TC
    )(x_t, w_sh, b_sh, w_heads, b_heads)
    return mul_t, div_t


@jax.jit
def hard_parameter_sharing_forward(x, prepared):
    """Torch-compatible wrapper: x (B, in) -> (mul (B, task), div (B, task)).

    The boundary transposes are extra XLA passes; prefer the *_fm path when the
    caller can keep activations feature-major.
    """
    mul_t, div_t = hard_parameter_sharing_forward_fm(x.T, prepared)
    return mul_t.T, div_t.T


def init_params(key, shared_size=16, task_size=8, in_features=2):
    """torch.nn.Linear-style init, PyTorch (out_features, in_features) layout."""
    ks = jax.random.split(key, 6)

    def linear(kw, kb, fan_in, fan_out):
        bound = 1.0 / float(fan_in) ** 0.5
        w = jax.random.uniform(kw, (fan_out, fan_in), jnp.float32, -bound, bound)
        b = jax.random.uniform(kb, (fan_out,), jnp.float32, -bound, bound)
        return w, b

    w_sh, b_sh = linear(ks[0], ks[1], in_features, shared_size)
    w_mul, b_mul = linear(ks[2], ks[3], shared_size, task_size)
    w_div, b_div = linear(ks[4], ks[5], shared_size, task_size)
    return (w_sh, b_sh, w_mul, b_mul, w_div, b_div)


def prepare_params(params):
    """One-time packing into kernel-ready arrays (head fusion happens here,
    NOT inside every forward call)."""
    w_sh, b_sh, w_mul, b_mul, w_div, b_div = params
    w_heads = jnp.concatenate([w_mul, w_div], axis=0)        # (2*task, shared)
    b_heads = jnp.concatenate([b_mul, b_div], axis=0)        # (2*task,)
    return (w_sh, b_sh.reshape(-1, 1), w_heads, b_heads.reshape(-1, 1))


def _reference_forward(x, params):
    """Pure-JAX reference, identical math to the PyTorch module."""
    w_sh, b_sh, w_mul, b_mul, w_div, b_div = params
    h = jnp.maximum(x @ w_sh.T + b_sh, 0.0)
    return h @ w_mul.T + b_mul, h @ w_div.T + b_div


if __name__ == "__main__":
    key = jax.random.PRNGKey(0)
    k_x, k_x2, k_p = jax.random.split(key, 3)

    params = init_params(k_p, shared_size=16, task_size=8)
    prepared = prepare_params(params)

    # Small deterministic example (single block, grid=(1,)), torch-style API.
    batch = 8
    x = jax.random.normal(k_x, (batch, 2), jnp.float32)
    mul_out, div_out = hard_parameter_sharing_forward(x, prepared)
    jax.block_until_ready((mul_out, div_out))

    ref_mul, ref_div = _reference_forward(x, params)
    assert mul_out.shape == (batch, 8) and div_out.shape == (batch, 8)
    assert jnp.allclose(mul_out, ref_mul, atol=1e-5, rtol=1e-5)
    assert jnp.allclose(div_out, ref_div, atol=1e-5, rtol=1e-5)

    # Larger, non-tile-multiple batch on the feature-major fast path:
    # exercises the ragged last block, the >=2-step parallel grid and the
    # lane-dense (task, B) outputs with no wrapper-side passes.
    batch2 = 600
    x2 = jax.random.normal(k_x2, (batch2, 2), jnp.float32)
    mul2_t, div2_t = hard_parameter_sharing_forward_fm(x2.T, prepared)
    jax.block_until_ready((mul2_t, div2_t))

    ref_mul2, ref_div2 = _reference_forward(x2, params)
    assert mul2_t.shape == (8, batch2) and div2_t.shape == (8, batch2)
    assert jnp.allclose(mul2_t, ref_mul2.T, atol=1e-5, rtol=1e-5)
    assert jnp.allclose(div2_t, ref_div2.T, atol=1e-5, rtol=1e-5)

    print("KERNEL_OK")
</pallas_src>

<mosaic_0001>
module attributes {stable_mosaic.version = 11 : i64} {
  func.func @_hard_sharing_kernel(%arg0: i32, %arg1: memref<2x8xf32, #tpu.memory_space<vmem>>, %arg2: memref<16x2xf32, #tpu.memory_space<vmem>>, %arg3: memref<16x1xf32, #tpu.memory_space<vmem>>, %arg4: memref<16x16xf32, #tpu.memory_space<vmem>>, %arg5: memref<16x1xf32, #tpu.memory_space<vmem>>, %arg6: memref<8x8xf32, #tpu.memory_space<vmem>>, %arg7: memref<8x8xf32, #tpu.memory_space<vmem>>) attributes {dimension_semantics = [#tpu.dimension_semantics<parallel>], iteration_bounds = array<i64: 1>, scalar_prefetch = 0 : i64, scratch_operands = 0 : i64, tpu.core_type = #tpu.core_type<tc>, window_params = [{transform_indices = @transform_0, window_bounds = array<i64: 2, 8>}, {pipeline_mode = #tpu.pipeline_mode<synchronous>, transform_indices = @transform_1, window_bounds = array<i64: 16, 2>}, {pipeline_mode = #tpu.pipeline_mode<synchronous>, transform_indices = @transform_2, window_bounds = array<i64: 16, 1>}, {pipeline_mode = #tpu.pipeline_mode<synchronous>, transform_indices = @transform_3, window_bounds = array<i64: 16, 16>}, {pipeline_mode = #tpu.pipeline_mode<synchronous>, transform_indices = @transform_4, window_bounds = array<i64: 16, 1>}, {transform_indices = @transform_5, window_bounds = array<i64: 8, 8>}, {transform_indices = @transform_6, window_bounds = array<i64: 8, 8>}]} {
    %c0 = arith.constant 0 : index
    %c0_0 = arith.constant 0 : index
    %0 = vector.load %arg1[%c0, %c0_0] : memref<2x8xf32, #tpu.memory_space<vmem>>, vector<2x8xf32>
    %c0_1 = arith.constant 0 : index
    %c0_2 = arith.constant 0 : index
    %1 = vector.load %arg2[%c0_1, %c0_2] : memref<16x2xf32, #tpu.memory_space<vmem>>, vector<16x2xf32>
    %c0_3 = arith.constant 0 : index
    %c0_4 = arith.constant 0 : index
    %2 = vector.load %arg3[%c0_3, %c0_4] : memref<16x1xf32, #tpu.memory_space<vmem>>, vector<16x1xf32>
    %3 = vector.extract_strided_slice %1 {offsets = [0, 0], sizes = [16, 1], strides = [1, 1]} : vector<16x2xf32> to vector<16x1xf32>
    %4 = vector.extract_strided_slice %0 {offsets = [0, 0], sizes = [1, 8], strides = [1, 1]} : vector<2x8xf32> to vector<1x8xf32>
    %5 = vector.broadcast %3 : vector<16x1xf32> to vector<16x8xf32>
    %6 = vector.broadcast %4 : vector<1x8xf32> to vector<16x8xf32>
    %7 = arith.mulf %5, %6 : vector<16x8xf32>
    %8 = vector.broadcast %2 : vector<16x1xf32> to vector<16x8xf32>
    %9 = arith.addf %8, %7 : vector<16x8xf32>
    %10 = vector.extract_strided_slice %1 {offsets = [0, 1], sizes = [16, 1], strides = [1, 1]} : vector<16x2xf32> to vector<16x1xf32>
    %11 = vector.extract_strided_slice %0 {offsets = [1, 0], sizes = [1, 8], strides = [1, 1]} : vector<2x8xf32> to vector<1x8xf32>
    %12 = vector.broadcast %10 : vector<16x1xf32> to vector<16x8xf32>
    %13 = vector.broadcast %11 : vector<1x8xf32> to vector<16x8xf32>
    %14 = arith.mulf %12, %13 : vector<16x8xf32>
    %15 = arith.addf %9, %14 : vector<16x8xf32>
    %cst = arith.constant 0.000000e+00 : f32
    %16 = vector.broadcast %cst : f32 to vector<16x8xf32>
    %17 = arith.maximumf %15, %16 : vector<16x8xf32>
    %c0_5 = arith.constant 0 : index
    %c0_6 = arith.constant 0 : index
    %18 = vector.load %arg4[%c0_5, %c0_6] : memref<16x16xf32, #tpu.memory_space<vmem>>, vector<16x16xf32>
    %cst_7 = arith.constant dense<0.000000e+00> : vector<16x8xf32>
    %19 = tpu.matmul %18, %17, %cst_7 {dimension_numbers = #tpu.dot_dimension_numbers<[1], [0], [0], [1], [0, 0, 1, 1], [], []>} : vector<16x16xf32>, vector<16x8xf32>, vector<16x8xf32> -> vector<16x8xf32>
    %c0_8 = arith.constant 0 : index
    %c0_9 = arith.constant 0 : index
    %20 = vector.load %arg5[%c0_8, %c0_9] : memref<16x1xf32, #tpu.memory_space<vmem>>, vector<16x1xf32>
    %21 = vector.broadcast %20 : vector<16x1xf32> to vector<16x8xf32>
    %22 = arith.addf %19, %21 : vector<16x8xf32>
    %23 = vector.extract_strided_slice %22 {offsets = [0, 0], sizes = [8, 8], strides = [1, 1]} : vector<16x8xf32> to vector<8x8xf32>
    %c0_10 = arith.constant 0 : index
    %c0_11 = arith.constant 0 : index
    %24 = vector.load %arg6[%c0_10, %c0_11] : memref<8x8xf32, #tpu.memory_space<vmem>>, vector<8x8xf32>
    tpu.vector_store %arg6[%c0_10, %c0_11], %23 {strides = array<i32>} : memref<8x8xf32, #tpu.memory_space<vmem>>, vector<8x8xf32>,
    %25 = vector.extract_strided_slice %22 {offsets = [8, 0], sizes = [8, 8], strides = [1, 1]} : vector<16x8xf32> to vector<8x8xf32>
    %c0_12 = arith.constant 0 : index
    %c0_13 = arith.constant 0 : index
    %26 = vector.load %arg7[%c0_12, %c0_13] : memref<8x8xf32, #tpu.memory_space<vmem>>, vector<8x8xf32>
    tpu.vector_store %arg7[%c0_12, %c0_13], %25 {strides = array<i32>} : memref<8x8xf32, #tpu.memory_space<vmem>>, vector<8x8xf32>,
    return
  }
  func.func @transform_0(%arg0: i32) -> (i32, i32) {
    %c0_i32 = arith.constant 0 : i32
    %c0_i32_0 = arith.constant 0 : i32
    return %c0_i32, %arg0 : i32, i32
  }
  func.func @transform_1(%arg0: i32) -> (i32, i32) {
    %c0_i32 = arith.constant 0 : i32
    %c0_i32_0 = arith.constant 0 : i32
    %c0_i32_1 = arith.constant 0 : i32
    return %c0_i32, %c0_i32_0 : i32, i32
  }
  func.func @transform_2(%arg0: i32) -> (i32, i32) {
    %c0_i32 = arith.constant 0 : i32
    %c0_i32_0 = arith.constant 0 : i32
    %c0_i32_1 = arith.constant 0 : i32
    return %c0_i32, %c0_i32_0 : i32, i32
  }
  func.func @transform_3(%arg0: i32) -> (i32, i32) {
    %c0_i32 = arith.constant 0 : i32
    %c0_i32_0 = arith.constant 0 : i32
    %c0_i32_1 = arith.constant 0 : i32
    return %c0_i32, %c0_i32_0 : i32, i32
  }
  func.func @transform_4(%arg0: i32) -> (i32, i32) {
    %c0_i32 = arith.constant 0 : i32
    %c0_i32_0 = arith.constant 0 : i32
    %c0_i32_1 = arith.constant 0 : i32
    return %c0_i32, %c0_i32_0 : i32, i32
  }
  func.func @transform_5(%arg0: i32) -> (i32, i32) {
    %c0_i32 = arith.constant 0 : i32
    %c0_i32_0 = arith.constant 0 : i32
    return %c0_i32, %arg0 : i32, i32
  }
  func.func @transform_6(%arg0: i32) -> (i32, i32) {
    %c0_i32 = arith.constant 0 : i32
    %c0_i32_0 = arith.constant 0 : i32
    return %c0_i32, %arg0 : i32, i32
  }
}

</mosaic_0001>

<llo_original>
// kernel: hard_parameter_sharing_forward_fm.1
$region0: #{hard_parameter_sharing_forward_fm.1}
  #allocation0 [shape = 'u32[]', space=smem, size = 0x4, offset = 0x4, fixed_abs, tag = 'smem constant byte address 0x4 - core index']
  #allocation1 [shape = 'u32[72,128]{1,0:T(1,128)}', space=vmem, size = 0x9000, scoped, tag = 'internal scratch']
  %s0 = inlined_call_operand.vmem [shape: f32[2,8], index: 0, kind: input, shape index: {}]
  %s1 = inlined_call_operand.vmem [shape: f32[16,2], index: 1, kind: input, shape index: {}]
  %s2 = inlined_call_operand.vmem [shape: f32[16,1], index: 2, kind: input, shape index: {}]
  %s3 = inlined_call_operand.vmem [shape: f32[16,16], index: 3, kind: input, shape index: {}]
  %s4 = inlined_call_operand.vmem [shape: f32[16,1], index: 4, kind: input, shape index: {}]
  %s5 = inlined_call_operand.hbm [shape: f32[8,8], index: 5, kind: output, shape index: {0}]
  %s6 = inlined_call_operand.hbm [shape: f32[8,8], index: 6, kind: output, shape index: {1}]
  %7 = xla_tuple %s5, %s6
  %s8 = sld [smem:[#allocation0]]
  $region38: #{hard_parameter_sharing_forward_fm.1} parent=0
    _
  %s10 = ssub.s32 1, %s8
  %s11 = scalar_select 0, %s10, %s8
  $region1: #{hard_parameter_sharing_forward_fm.1} parent=0
    #allocation2 [shape = 'u8[4096]{0}', space=vmem, size = 0x1000, scoped, tag = 'output window, operand 0, single buffered']
    #allocation3 [shape = 's32[1]{0}', space=sflag, size = 0x4, scoped, tag = 'scoped memory for hard_parameter_sharing_forward_fm.1']
    #allocation4 [shape = 'u8[4096]{0}', space=vmem, size = 0x1000, scoped, tag = 'output window, operand 1, single buffered']
    #allocation5 [shape = 's32[1]{0}', space=sflag, size = 0x4, scoped, tag = 'scoped memory for hard_parameter_sharing_forward_fm.1']
    %12 = vsyncpa [#allocation3], 0
    %13 = vsyncpa [#allocation5], 0
    // Predicated region
    $region2: #{hard_parameter_sharing_forward_fm.1} parent=1 // pred_check
      _
    $region3: #{hard_parameter_sharing_forward_fm.1} parent=1 // pred_check_branch
      %15 = sbr.rel (0) target = $region5
    $region4: #{hard_parameter_sharing_forward_fm.1} parent=1 // pred_region
      _
    $region5: #{hard_parameter_sharing_forward_fm.1} parent=1 // pred_fallthru
      _
    // Predicated region
    $region6: #{hard_parameter_sharing_forward_fm.1} parent=1 // pred_check
      _
    $region7: #{hard_parameter_sharing_forward_fm.1} parent=1 // pred_check_branch
      %17 = sbr.rel (0) target = $region9
    $region8: #{hard_parameter_sharing_forward_fm.1} parent=1 // pred_region
      _
    $region9: #{hard_parameter_sharing_forward_fm.1} parent=1 // pred_fallthru
      _
    // Predicated region
    $region10: #{hard_parameter_sharing_forward_fm.1} parent=1 // pred_check
      _
    $region11: #{hard_parameter_sharing_forward_fm.1} parent=1 // pred_check_branch
      %19 = sbr.rel (0) target = $region13
    $region12: #{hard_parameter_sharing_forward_fm.1} parent=1 // pred_region
      _
    $region13: #{hard_parameter_sharing_forward_fm.1} parent=1 // pred_fallthru
      _
    // Predicated region
    $region14: #{hard_parameter_sharing_forward_fm.1} parent=1 // pred_check
      _
    $region15: #{hard_parameter_sharing_forward_fm.1} parent=1 // pred_check_branch
      %21 = sbr.rel (0) target = $region17
    $region16: #{hard_parameter_sharing_forward_fm.1} parent=1 // pred_region
      _
    $region17: #{hard_parameter_sharing_forward_fm.1} parent=1 // pred_fallthru
      _
    // Predicated region
    $region18: #{hard_parameter_sharing_forward_fm.1} parent=1 // pred_check
      _
    $region19: #{hard_parameter_sharing_forward_fm.1} parent=1 // pred_check_branch
      %23 = sbr.rel (0) target = $region21
    $region20: #{hard_parameter_sharing_forward_fm.1} parent=1 // pred_region
      _
    $region21: #{hard_parameter_sharing_forward_fm.1} parent=1 // pred_fallthru
      _
    %v24 = vld [vmem:[%s0] sm:$0x3]
    %v25 = vld [vmem:[%s1] sm:$0xff]
    %v26 = vld [vmem:[%s1 + $0x8] sm:$0xff]
    %v27 = vld [vmem:[%s2] sm:$0xff]
    %v28 = vld [vmem:[%s2 + $0x8] sm:$0xff]
    %30 = vset.pattern.permute.xlu0 0
    %31 = vperm.xlu0 %30, %v25
    %v32 = vpop.permute.xlu0 %31
    %35 = vset.pattern.permute.xlu0 0
    %36 = vperm.xlu0 %35, %v26
    %v37 = vpop.permute.xlu0 %36
    %v39 = vperm.slane %v24, 0
    %v40 = vmul.f32 %v32, %v39
    %v41 = vmul.f32 %v37, %v39
    %43 = vset.pattern.permute.xlu0 0
    %44 = vperm.xlu0 %43, %v27
    %v45 = vpop.permute.xlu0 %44
    %48 = vset.pattern.permute.xlu0 0
    %49 = vperm.xlu0 %48, %v28
    %v50 = vpop.permute.xlu0 %49
    %v52 = vadd.f32 %v45, %v40
    %v53 = vadd.f32 %v50, %v41
    %54 = vset.pattern.permute.xlu0 1
    %55 = vperm.xlu0 %54, %v25
    %v56 = vpop.permute.xlu0 %55
    %58 = vset.pattern.permute.xlu0 1
    %59 = vperm.xlu0 %58, %v26
    %v60 = vpop.permute.xlu0 %59
    %v62 = vperm.slane %v24, 1
    %v63 = vmul.f32 %v56, %v62
    %v64 = vmul.f32 %v60, %v62
    %v65 = vadd.f32 %v52, %v63
    %v66 = vadd.f32 %v53, %v64
    %v67 = vmax.f32 %v65, 0.0
    %v68 = vmax.f32 %v66, 0.0
    %v69 = vld [vmem:[%s3] sm:$0xff]
    %v70 = vld [vmem:[%s3 + $0x8] sm:$0xff]
    %v71 = vld [vmem:[%s4] sm:$0xff]
    %v72 = vld [vmem:[%s4 + $0x8] sm:$0xff]
    %74 = vset.pattern.permute.xlu0 0
    %75 = vperm.xlu0 %74, %v71
    %v76 = vpop.permute.xlu0 %75
    %79 = vset.pattern.permute.xlu0 0
    %80 = vperm.xlu0 %79, %v72
    %v81 = vpop.permute.xlu0 %80
    %vm83 = vcmask 130048
    %v85 = vsel %vm83, %v69, 0
    %v88 = vsel %vm83, %v70, 0
    %90 = vmatpush.msra.mxu0 0.0
    %91 = vmatpush.msra.mxu0 0.0
    %92 = vmatpush.msra.mxu0 0.0
    %93 = vmatpush.msra.mxu0 0.0
    %94 = vmatpush.msra.mxu0 0.0
    %95 = vmatpush.msra.mxu0 0.0
    %96 = vmatpush.msra.mxu0 0.0
    %97 = vmatpush.msra.mxu0 0.0
    %98 = vmatpush.msra.mxu0 0.0
    %99 = vmatpush.msra.mxu0 0.0
    %100 = vmatpush.msra.mxu0 0.0
    %101 = vmatpush.msra.mxu0 0.0
    %102 = vmatpush.msra.mxu0 0.0
    %103 = vmatpush.msra.mxu0 0.0
    %104 = vmatpush.msra.mxu0 %v68
    %105 = vmatpush.msra.mxu0 %v67
    %106 = vmatmul.f32.gmra.mxu0 %v85
    %v107 = vpop.f32.mrf.mxu0
    %v108 = vadd.f32 %v76, %v107
    %109 = vmatmul.f32.gmra.mxu0 %v88
    %v110 = vpop.f32.mrf.mxu0
    %v111 = vadd.f32 %v81, %v110
    %112 = vdwg.mxu0
    %vm113 = vcmask 64512
    %114 = vst.msk [vmem:[#allocation2] sm:$0xff] %vm113, %v108
    %115 = vst.msk [vmem:[#allocation4] sm:$0xff] %vm113, %v111
    // Predicated region
    $region22: #{hard_parameter_sharing_forward_fm.1} parent=1 // pred_check
      _
    $region23: #{hard_parameter_sharing_forward_fm.1} parent=1 // pred_check_branch
      %117 = sbr.rel (0) target = $region25
    $region24: #{hard_parameter_sharing_forward_fm.1} parent=1 // pred_region
      %119 = vsyncadd [#allocation3], 0
      %s121 = sshll.u32 [#allocation2], 4
      %s122 = int_to_ptr.vmem [resolvable:$true] %s121
      %s123 = sshll.u32 %s5, 4
      %s124 = int_to_ptr.hbm [resolvable:$true] %s123
      %126 = dma.vmem_to_hbm [thread:$0]  %s122, 128, %s124, [#allocation3]
    $region25: #{hard_parameter_sharing_forward_fm.1} parent=1 // pred_fallthru
      _
    // Predicated region
    $region26: #{hard_parameter_sharing_forward_fm.1} parent=1 // pred_check
      _
    $region27: #{hard_parameter_sharing_forward_fm.1} parent=1 // pred_check_branch
      %128 = sbr.rel (0) target = $region29
    $region28: #{hard_parameter_sharing_forward_fm.1} parent=1 // pred_region
      %130 = vsyncadd [#allocation5], 0
      %s132 = sshll.u32 [#allocation4], 4
      %s133 = int_to_ptr.vmem [resolvable:$true] %s132
      %s134 = sshll.u32 %s6, 4
      %s135 = int_to_ptr.hbm [resolvable:$true] %s134
      %137 = dma.vmem_to_hbm [thread:$0]  %s133, 128, %s135, [#allocation5]
    $region29: #{hard_parameter_sharing_forward_fm.1} parent=1 // pred_fallthru
      _
    // Predicated region
    $region30: #{hard_parameter_sharing_forward_fm.1} parent=1 // pred_check
      _
    $region31: #{hard_parameter_sharing_forward_fm.1} parent=1 // pred_check_branch
      %139 = sbr.rel (0) target = $region33
    $region32: #{hard_parameter_sharing_forward_fm.1} parent=1 // pred_region
      %141 = dma.done [#allocation3], 128
    $region33: #{hard_parameter_sharing_forward_fm.1} parent=1 // pred_fallthru
      _
    // Predicated region
    $region34: #{hard_parameter_sharing_forward_fm.1} parent=1 // pred_check
      _
    $region35: #{hard_parameter_sharing_forward_fm.1} parent=1 // pred_check_branch
      %143 = sbr.rel (0) target = $region37
    $region36: #{hard_parameter_sharing_forward_fm.1} parent=1 // pred_region
      %145 = dma.done [#allocation5], 128
    $region37: #{hard_parameter_sharing_forward_fm.1} parent=1 // pred_fallthru
      _
    %146 = vsyncpa [#allocation3], 1
    %147 = vsyncpa [#allocation5], 1

</llo_original>
